<compile_context>
chip_gen: v5e
topology: v5e:2x2
jax: 0.10.0
libtpu: 0.0.40
codegen_flags: <defaults>
</compile_context>

<pallas_src>
import functools

import jax
import jax.numpy as jnp
from jax.experimental import pallas as pl
from jax.experimental.pallas import tpu as pltpu


# --------------------------- device / tiling plan ---------------------------

def _round_up(x: int, m: int) -> int:
    return ((x + m - 1) // m) * m


def _vmem_plan():
    """Per-generation scoped-VMEM budgets.

    v5e/v6e have 128 MiB VMEM -> use ~96 MiB scoped / ~80 MiB tile budget and
    allow row tiles up to 2048.  v7x has 64 MiB/TC -> cap at ~40 MiB scoped to
    leave headroom for compiler-internal scratch.
    """
    cap = 64 << 20
    try:
        info = pltpu.get_tpu_info()
        cap = int(getattr(info, "vmem_capacity_bytes", cap)) or cap
    except Exception:  # be robust if the query is unavailable
        pass
    if cap >= (96 << 20):
        return 96 << 20, 80 << 20, 2048
    limit = min(40 << 20, max(cap - (24 << 20), 16 << 20))
    return limit, max(limit - (12 << 20), 8 << 20), 1024


def _plan_tiling(rows, dim, hidden, x_dtype, w_dtype, out_dtype):
    """Pick (row_tile, hidden_tile th, n_hidden_chunks, hidden_pad, vmem_limit)."""
    vmem_limit, tile_budget, max_row_tile = _vmem_plan()
    x_isz = jnp.dtype(x_dtype).itemsize
    w_isz = jnp.dtype(w_dtype).itemsize
    o_isz = jnp.dtype(out_dtype).itemsize

    # Hidden-axis tiling: one expert chunk's double-buffered weights must fit
    # in ~half the tile budget so the kernel scales to dim>=2048, hidden>=8192.
    hidden128 = _round_up(hidden, 128)
    w_budget = tile_budget // 2
    th_max = max(128, ((w_budget // (2 * 3 * dim * w_isz)) // 128) * 128)
    if hidden128 <= th_max:
        n_h, th = 1, hidden128
    else:
        n_h = -(-hidden128 // th_max)
        th = _round_up(-(-hidden128 // n_h), 128)
    hidden_pad = n_h * th
    weight_bytes = 2 * 3 * dim * th * w_isz          # double-buffered w13 + w2 chunk

    sub = 16 if jnp.dtype(x_dtype).itemsize < 4 else 8
    # Per-row VMEM: double-buffered x / out tiles, f32 accumulator, lane-padded
    # combine column, f32 SwiGLU temporaries for one hidden chunk.
    per_row = (2 * dim * x_isz + 2 * dim * o_isz + 4 * dim
               + 2 * 128 * 4
               + 12 * th + 4 * dim)
    budget = max(tile_budget - weight_bytes, 1 << 20)
    row_tile = (min(max_row_tile, budget // per_row) // sub) * sub
    row_tile = max(sub, min(row_tile, _round_up(rows, sub)))
    return row_tile, th, n_h, hidden_pad, vmem_limit


# --------------------------------- kernel -----------------------------------

def _moe_expert_kernel(act_ref, x_ref, w13_ref, w2_ref, cw_ref, o_ref, acc_ref,
                       *, th, n_total):
    # grid = (row_tiles, n_experts_total, hidden_chunks); axes 1,2 are reductions.
    i = pl.program_id(0)
    e = pl.program_id(1)
    h = pl.program_id(2)

    @pl.when((e == 0) & (h == 0))
    def _init():
        acc_ref[...] = jnp.zeros_like(acc_ref)

    # Per-(row-tile, expert) routing flag prefetched into SMEM: skip all MXU
    # work for experts no token in this tile routes to.
    active = act_ref[i * n_total + e]

    @pl.when(active > 0)
    def _compute():
        x = x_ref[...]                                   # (tm, dim), compute dtype
        # Fused w1||w3 matmul: one MXU stream, static lane-aligned split.
        hcat = jnp.dot(x, w13_ref[0, 0], preferred_element_type=jnp.float32)
        h1 = hcat[:, :th]
        h3 = hcat[:, th:]
        sig = pl.reciprocal(1.0 + jnp.exp(-h1), approx=True)   # sigmoid on EUP
        hz = (h1 * sig) * h3                             # silu(x@w1) * (x@w3), f32
        y = jnp.dot(hz.astype(x.dtype), w2_ref[0, 0],
                    preferred_element_type=jnp.float32)  # (tm, dim) partial y
        # cw_ref[0] is the (tm, 1) per-token combine weight for expert e,
        # selected by the BlockSpec (no iota/where/lane-reduce needed).
        acc_ref[...] += cw_ref[0] * y

    @pl.when((e == pl.num_programs(1) - 1) & (h == pl.num_programs(2) - 1))
    def _store():
        o_ref[...] = acc_ref[...].astype(o_ref.dtype)


# --------------------------------- wrapper -----------------------------------

def moe_ffn_forward(x, gate_w, w1_e, w3_e, w2_e, shared=None, *,
                    top_k=2, norm_topk=True, compute_dtype=jnp.bfloat16):
    """MoEFFN forward (inference / eval path; dropout is identity in eval).

    x:          (batch, seq, dim)
    gate_w:     (n_routed_experts, dim)             (torch nn.Linear layout)
    w1_e, w3_e: (n_routed_experts, dim, hidden)     (pre-transposed)
    w2_e:       (n_routed_experts, hidden, dim)
    shared:     optional (w1s, w3s, w2s) shared-expert weights
    compute_dtype: MXU operand dtype for the expert FFNs (default bf16;
                   accumulation is always f32).
    """
    batch, seq, dim = x.shape
    n_experts, _, hidden = w1_e.shape
    rows = batch * seq
    out_dtype = x.dtype

    x2d = x.reshape(rows, dim)

    # ---------- 1) gating: tiny (rows, E) GEMM + softmax + top-k (JAX) ----------
    logits = jnp.dot(x2d.astype(jnp.float32), gate_w.astype(jnp.float32).T)
    scores = jax.nn.softmax(logits, axis=-1)
    # TODO(synk): top-k expert selection has no clean Pallas equivalent; done in JAX.
    topk_w, topk_idx = jax.lax.top_k(scores, top_k)
    if top_k > 1 and norm_topk:
        topk_w = topk_w / (jnp.sum(topk_w, axis=-1, keepdims=True) + 1e-20)
    one_hot = jax.nn.one_hot(topk_idx, n_experts, dtype=jnp.float32)   # (rows, k, E)
    combine = jnp.einsum('rke,rk->re', one_hot, topk_w)                # (rows, E)

    # ---------- fold the shared expert in as one extra expert (weight 1) ----------
    w1_all, w3_all, w2_all = w1_e, w3_e, w2_e
    n_shared = 0
    if shared is not None:
        w1s, w3s, w2s = shared
        w1_all = jnp.concatenate([w1_e, w1s[None]], axis=0)
        w3_all = jnp.concatenate([w3_e, w3s[None]], axis=0)
        w2_all = jnp.concatenate([w2_e, w2s[None]], axis=0)
        combine = jnp.concatenate(
            [combine, jnp.ones((rows, 1), jnp.float32)], axis=-1)
        n_shared = 1
    n_total = n_experts + n_shared

    # ---------- 2) tiling plan (per-generation VMEM budget, hidden chunks) ----------
    row_tile, th, n_h, hidden_pad, vmem_limit = _plan_tiling(
        rows, dim, hidden, compute_dtype, compute_dtype, out_dtype)
    rows_pad = _round_up(rows, row_tile)
    n_row_tiles = rows_pad // row_tile

    if rows_pad != rows:
        x2d = jnp.pad(x2d, ((0, rows_pad - rows), (0, 0)))
        combine = jnp.pad(combine, ((0, rows_pad - rows), (0, 0)))   # pad rows -> weight 0

    # Per-(row-tile, expert) activity flags -> SMEM via scalar prefetch.
    active = (combine.reshape(n_row_tiles, row_tile, n_total).max(axis=1) > 0.0)
    active = active.astype(jnp.int32).reshape(-1)                     # (n_row_tiles*n_total,)
    # Combine column per expert as a (tm, 1) sublane vector block.
    combine_col = jnp.transpose(combine)[..., None]                   # (n_total, rows_pad, 1)

    # ---------- 3) weight layout: pad hidden, chunk, fuse w1||w3, cast ----------
    if hidden_pad != hidden:
        w1_all = jnp.pad(w1_all, ((0, 0), (0, 0), (0, hidden_pad - hidden)))
        w3_all = jnp.pad(w3_all, ((0, 0), (0, 0), (0, hidden_pad - hidden)))
        w2_all = jnp.pad(w2_all, ((0, 0), (0, hidden_pad - hidden), (0, 0)))
    w1c = w1_all.reshape(n_total, dim, n_h, th).transpose(0, 2, 1, 3)
    w3c = w3_all.reshape(n_total, dim, n_h, th).transpose(0, 2, 1, 3)
    w13 = jnp.concatenate([w1c, w3c], axis=-1).astype(compute_dtype)   # (E, n_h, dim, 2*th)
    w2c = w2_all.reshape(n_total, n_h, th, dim).astype(compute_dtype)  # (E, n_h, th, dim)
    x_in = x2d.astype(compute_dtype)

    c_isz = jnp.dtype(compute_dtype).itemsize
    o_isz = jnp.dtype(out_dtype).itemsize
    moe_cost = pl.CostEstimate(
        flops=rows_pad * (top_k + n_shared) * 6 * dim * hidden_pad,
        transcendentals=rows_pad * (top_k + n_shared) * hidden_pad,
        bytes_accessed=(rows_pad * dim * c_isz                                   # x (block-resident per tile)
                        + n_row_tiles * n_total * 3 * dim * hidden_pad * c_isz   # expert weights
                        + n_total * rows_pad * 4                                 # combine columns
                        + rows_pad * dim * o_isz),                               # output
    )

    kernel = functools.partial(_moe_expert_kernel, th=th, n_total=n_total)
    out = pl.pallas_call(
        kernel,
        out_shape=jax.ShapeDtypeStruct((rows_pad, dim), out_dtype),
        grid_spec=pltpu.PrefetchScalarGridSpec(
            num_scalar_prefetch=1,
            grid=(n_row_tiles, n_total, n_h),          # reduction axes (expert, hidden) last
            in_specs=[
                pl.BlockSpec((row_tile, dim), lambda i, e, h, act: (i, 0)),            # x
                pl.BlockSpec((1, 1, dim, 2 * th), lambda i, e, h, act: (e, h, 0, 0)),  # w1||w3 chunk
                pl.BlockSpec((1, 1, th, dim), lambda i, e, h, act: (e, h, 0, 0)),      # w2 chunk
                pl.BlockSpec((1, row_tile, 1), lambda i, e, h, act: (e, i, 0)),        # combine col
            ],
            out_specs=pl.BlockSpec((row_tile, dim), lambda i, e, h, act: (i, 0)),
            scratch_shapes=[pltpu.VMEM((row_tile, dim), jnp.float32)],
        ),
        compiler_params=pltpu.CompilerParams(
            dimension_semantics=("parallel", "arbitrary", "arbitrary"),
            vmem_limit_bytes=vmem_limit,
        ),
        cost_estimate=moe_cost,
    )(active, x_in, w13, w2c, combine_col)

    return out[:rows].reshape(batch, seq, dim)


# ----------------------------------- demo ------------------------------------

if __name__ == "__main__":
    key = jax.random.PRNGKey(0)

    # Small LLMconfig-consistent shapes.  multiple_of=128 gives hidden=384
    # (a 128 multiple, per the perf review) so lane slices are aligned.
    batch, seq, dim = 2, 8, 128
    multiple_of = 128
    hidden = int(2 * (4 * dim) / 3)
    hidden = multiple_of * ((hidden + multiple_of - 1) // multiple_of)   # 384
    n_routed_experts = 4
    top_k = 2            # num_experts_per_tok
    norm_topk = True     # norm_topk_experts
    # n_shared_experts = 1 -> shared expert enabled; dropout = 0 (inference).

    ks = jax.random.split(key, 8)
    scale = 0.05
    x = jax.random.normal(ks[0], (batch, seq, dim), dtype=jnp.float32)
    gate_w = jax.random.normal(ks[1], (n_routed_experts, dim), jnp.float32) / jnp.sqrt(dim * 1.0)
    w1_e = jax.random.normal(ks[2], (n_routed_experts, dim, hidden), jnp.float32) * scale
    w3_e = jax.random.normal(ks[3], (n_routed_experts, dim, hidden), jnp.float32) * scale
    w2_e = jax.random.normal(ks[4], (n_routed_experts, hidden, dim), jnp.float32) * scale
    w1_s = jax.random.normal(ks[5], (dim, hidden), jnp.float32) * scale
    w3_s = jax.random.normal(ks[6], (dim, hidden), jnp.float32) * scale
    w2_s = jax.random.normal(ks[7], (hidden, dim), jnp.float32) * scale

    out = moe_ffn_forward(x, gate_w, w1_e, w3_e, w2_e,
                          shared=(w1_s, w3_s, w2_s),
                          top_k=top_k, norm_topk=norm_topk)
    out = jax.block_until_ready(out)

    # ------------------------- pure-JAX f32 reference -------------------------
    xf = x.reshape(-1, dim)
    logits = xf @ gate_w.T
    ref_scores = jax.nn.softmax(logits, axis=-1)
    tw, ti = jax.lax.top_k(ref_scores, top_k)
    tw = tw / (jnp.sum(tw, axis=-1, keepdims=True) + 1e-20)
    y_ref = jnp.zeros_like(xf)
    for e in range(n_routed_experts):
        h = jax.nn.silu(xf @ w1_e[e]) * (xf @ w3_e[e])
        w_e = jnp.sum(jnp.where(ti == e, tw, 0.0), axis=-1, keepdims=True)
        y_ref = y_ref + w_e * (h @ w2_e[e])
    hs = jax.nn.silu(xf @ w1_s) * (xf @ w3_s)
    y_ref = (y_ref + hs @ w2_s).reshape(batch, seq, dim)

    assert out.shape == x.shape and out.dtype == x.dtype
    max_err = float(jnp.max(jnp.abs(out - y_ref)))
    # Expert matmuls run in bf16 on the MXU (f32 accumulation) -> looser
    # tolerance vs the f32 reference, as flagged in the perf review.
    assert jnp.allclose(out, y_ref, atol=2e-2, rtol=2e-2), max_err

    print("KERNEL_OK")
</pallas_src>

<mosaic_0001>
module attributes {stable_mosaic.version = 11 : i64} {
  func.func @_moe_expert_kernel(%arg0: i32, %arg1: i32, %arg2: i32, %arg3: memref<5xi32, #tpu.memory_space<smem>>, %arg4: memref<16x128xbf16, #tpu.memory_space<vmem>>, %arg5: memref<1x1x128x768xbf16, #tpu.memory_space<vmem>>, %arg6: memref<1x1x384x128xbf16, #tpu.memory_space<vmem>>, %arg7: memref<1x16x1xf32, #tpu.memory_space<vmem>>, %arg8: memref<16x128xf32, #tpu.memory_space<vmem>>, %arg9: memref<16x128xf32, #tpu.memory_space<vmem>>) attributes {dimension_semantics = [#tpu.dimension_semantics<parallel>, #tpu.dimension_semantics<arbitrary>, #tpu.dimension_semantics<arbitrary>], iteration_bounds = array<i64: 1, 5, 1>, scalar_prefetch = 1 : i64, scratch_operands = 1 : i64, tpu.core_type = #tpu.core_type<tc>, window_params = [{transform_indices = @transform_0, window_bounds = array<i64: 16, 128>}, {transform_indices = @transform_1, window_bounds = array<i64: 1, 1, 128, 768>}, {transform_indices = @transform_2, window_bounds = array<i64: 1, 1, 384, 128>}, {transform_indices = @transform_3, window_bounds = array<i64: 1, 16, 1>}, {transform_indices = @transform_4, window_bounds = array<i64: 16, 128>}]} {
    %c0_i32 = arith.constant 0 : i32
    %0 = arith.cmpi eq, %arg1, %c0_i32 : i32
    %c0_i32_0 = arith.constant 0 : i32
    %1 = arith.cmpi eq, %arg2, %c0_i32_0 : i32
    %2 = arith.andi %0, %1 : i1
    %3 = arith.extui %2 : i1 to i32
    %c0_i32_1 = arith.constant 0 : i32
    %4 = arith.cmpi ne, %3, %c0_i32_1 : i32
    scf.if %4 {
      %cst = arith.constant 0.000000e+00 : f32
      %17 = vector.broadcast %cst : f32 to vector<16x128xf32>
      %c0 = arith.constant 0 : index
      %c0_6 = arith.constant 0 : index
      %18 = vector.load %arg9[%c0, %c0_6] : memref<16x128xf32, #tpu.memory_space<vmem>>, vector<16x128xf32>
      tpu.vector_store %arg9[%c0, %c0_6], %17 {strides = array<i32>} : memref<16x128xf32, #tpu.memory_space<vmem>>, vector<16x128xf32>,
    } else {
    }
    %c5_i32 = arith.constant 5 : i32
    %5 = arith.muli %arg0, %c5_i32 : i32
    %6 = arith.addi %5, %arg1 : i32
    %7 = arith.index_cast %6 : i32 to index
    %8 = memref.load %arg3[%7] : memref<5xi32, #tpu.memory_space<smem>>
    %c0_i32_2 = arith.constant 0 : i32
    %9 = arith.cmpi sgt, %8, %c0_i32_2 : i32
    %10 = arith.extui %9 : i1 to i32
    %c0_i32_3 = arith.constant 0 : i32
    %11 = arith.cmpi ne, %10, %c0_i32_3 : i32
    scf.if %11 {
      %c0 = arith.constant 0 : index
      %c0_6 = arith.constant 0 : index
      %17 = vector.load %arg4[%c0, %c0_6] : memref<16x128xbf16, #tpu.memory_space<vmem>>, vector<16x128xbf16>
      %c0_7 = arith.constant 0 : index
      %c0_8 = arith.constant 0 : index
      %c0_9 = arith.constant 0 : index
      %c0_10 = arith.constant 0 : index
      %18 = vector.load %arg5[%c0_7, %c0_8, %c0_9, %c0_10] : memref<1x1x128x768xbf16, #tpu.memory_space<vmem>>, vector<1x1x128x768xbf16>
      %19 = vector.shape_cast %18 : vector<1x1x128x768xbf16> to vector<128x768xbf16>
      %cst = arith.constant dense<0.000000e+00> : vector<16x768xf32>
      %20 = tpu.matmul %17, %19, %cst {dimension_numbers = #tpu.dot_dimension_numbers<[1], [0], [0], [1], [0, 0, 1, 1], [], []>} : vector<16x128xbf16>, vector<128x768xbf16>, vector<16x768xf32> -> vector<16x768xf32>
      %21 = vector.extract_strided_slice %20 {offsets = [0, 0], sizes = [16, 384], strides = [1, 1]} : vector<16x768xf32> to vector<16x384xf32>
      %22 = vector.extract_strided_slice %20 {offsets = [0, 384], sizes = [16, 384], strides = [1, 1]} : vector<16x768xf32> to vector<16x384xf32>
      %cst_11 = arith.constant 0.000000e+00 : f32
      %23 = vector.broadcast %cst_11 : f32 to vector<16x384xf32>
      %24 = arith.subf %23, %21 : vector<16x384xf32>
      %25 = math.exp %24 : vector<16x384xf32>
      %cst_12 = arith.constant 1.000000e+00 : f32
      %26 = vector.broadcast %cst_12 : f32 to vector<16x384xf32>
      %27 = arith.addf %26, %25 : vector<16x384xf32>
      %28 = tpu.reciprocal %27 {approx = true} : vector<16x384xf32> -> vector<16x384xf32>
      %29 = arith.mulf %21, %28 : vector<16x384xf32>
      %30 = arith.mulf %29, %22 : vector<16x384xf32>
      %31 = arith.truncf %30 : vector<16x384xf32> to vector<16x384xbf16>
      %c0_13 = arith.constant 0 : index
      %c0_14 = arith.constant 0 : index
      %c0_15 = arith.constant 0 : index
      %c0_16 = arith.constant 0 : index
      %32 = vector.load %arg6[%c0_13, %c0_14, %c0_15, %c0_16] : memref<1x1x384x128xbf16, #tpu.memory_space<vmem>>, vector<1x1x384x128xbf16>
      %33 = vector.shape_cast %32 : vector<1x1x384x128xbf16> to vector<384x128xbf16>
      %cst_17 = arith.constant dense<0.000000e+00> : vector<16x128xf32>
      %34 = tpu.matmul %31, %33, %cst_17 {dimension_numbers = #tpu.dot_dimension_numbers<[1], [0], [0], [1], [0, 0, 1, 1], [], []>} : vector<16x384xbf16>, vector<384x128xbf16>, vector<16x128xf32> -> vector<16x128xf32>
      %c0_18 = arith.constant 0 : index
      %c0_19 = arith.constant 0 : index
      %35 = vector.load %arg9[%c0_18, %c0_19] : memref<16x128xf32, #tpu.memory_space<vmem>>, vector<16x128xf32>
      %c0_20 = arith.constant 0 : index
      %c0_21 = arith.constant 0 : index
      %c0_22 = arith.constant 0 : index
      %36 = vector.load %arg7[%c0_20, %c0_21, %c0_22] : memref<1x16x1xf32, #tpu.memory_space<vmem>>, vector<1x16x1xf32>
      %37 = vector.shape_cast %36 : vector<1x16x1xf32> to vector<16x1xf32>
      %38 = vector.broadcast %37 : vector<16x1xf32> to vector<16x128xf32>
      %39 = arith.mulf %38, %34 : vector<16x128xf32>
      %40 = arith.addf %35, %39 : vector<16x128xf32>
      %c0_23 = arith.constant 0 : index
      %c0_24 = arith.constant 0 : index
      %41 = vector.load %arg9[%c0_23, %c0_24] : memref<16x128xf32, #tpu.memory_space<vmem>>, vector<16x128xf32>
      tpu.vector_store %arg9[%c0_23, %c0_24], %40 {strides = array<i32>} : memref<16x128xf32, #tpu.memory_space<vmem>>, vector<16x128xf32>,
    } else {
    }
    %c4_i32 = arith.constant 4 : i32
    %12 = arith.cmpi eq, %arg1, %c4_i32 : i32
    %c0_i32_4 = arith.constant 0 : i32
    %13 = arith.cmpi eq, %arg2, %c0_i32_4 : i32
    %14 = arith.andi %12, %13 : i1
    %15 = arith.extui %14 : i1 to i32
    %c0_i32_5 = arith.constant 0 : i32
    %16 = arith.cmpi ne, %15, %c0_i32_5 : i32
    scf.if %16 {
      %c0 = arith.constant 0 : index
      %c0_6 = arith.constant 0 : index
      %17 = vector.load %arg9[%c0, %c0_6] : memref<16x128xf32, #tpu.memory_space<vmem>>, vector<16x128xf32>
      %c0_7 = arith.constant 0 : index
      %c0_8 = arith.constant 0 : index
      %18 = vector.load %arg8[%c0_7, %c0_8] : memref<16x128xf32, #tpu.memory_space<vmem>>, vector<16x128xf32>
      tpu.vector_store %arg8[%c0_7, %c0_8], %17 {strides = array<i32>} : memref<16x128xf32, #tpu.memory_space<vmem>>, vector<16x128xf32>,
    } else {
    }
    return
  }
  func.func @transform_0(%arg0: i32, %arg1: i32, %arg2: i32, %arg3: memref<5xi32, #tpu.memory_space<smem>>) -> (i32, i32) {
    %c0_i32 = arith.constant 0 : i32
    %c0_i32_0 = arith.constant 0 : i32
    return %arg0, %c0_i32 : i32, i32
  }
  func.func @transform_1(%arg0: i32, %arg1: i32, %arg2: i32, %arg3: memref<5xi32, #tpu.memory_space<smem>>) -> (i32, i32, i32, i32) {
    %c0_i32 = arith.constant 0 : i32
    %c0_i32_0 = arith.constant 0 : i32
    %c0_i32_1 = arith.constant 0 : i32
    return %arg1, %arg2, %c0_i32, %c0_i32_0 : i32, i32, i32, i32
  }
  func.func @transform_2(%arg0: i32, %arg1: i32, %arg2: i32, %arg3: memref<5xi32, #tpu.memory_space<smem>>) -> (i32, i32, i32, i32) {
    %c0_i32 = arith.constant 0 : i32
    %c0_i32_0 = arith.constant 0 : i32
    %c0_i32_1 = arith.constant 0 : i32
    return %arg1, %arg2, %c0_i32, %c0_i32_0 : i32, i32, i32, i32
  }
  func.func @transform_3(%arg0: i32, %arg1: i32, %arg2: i32, %arg3: memref<5xi32, #tpu.memory_space<smem>>) -> (i32, i32, i32) {
    %c0_i32 = arith.constant 0 : i32
    %c0_i32_0 = arith.constant 0 : i32
    return %arg1, %arg0, %c0_i32 : i32, i32, i32
  }
  func.func @transform_4(%arg0: i32, %arg1: i32, %arg2: i32, %arg3: memref<5xi32, #tpu.memory_space<smem>>) -> (i32, i32) {
    %c0_i32 = arith.constant 0 : i32
    %c0_i32_0 = arith.constant 0 : i32
    return %arg0, %c0_i32 : i32, i32
  }
}

</mosaic_0001>

<llo_original>
// kernel: tpu_custom_call.1
$region0: #{tpu_custom_call.1}
  #allocation0 [shape = 'u32[]', space=smem, size = 0x4, offset = 0x4, fixed_abs, tag = 'smem constant byte address 0x4 - core index']
  #allocation1 [shape = 'u32[72,128]{1,0:T(1,128)}', space=vmem, size = 0x9000, scoped, tag = 'internal scratch']
  #allocation2 [shape = 'f32[16,128]{1,0:T(8,128)}', space=vmem, size = 0x2000, scoped, tag = 'scratch operand']
  #allocation3 [shape = 's32[1]{0}', space=sflag, size = 0x4, scoped, tag = 'scoped memory for tpu_custom_call.1']
  #allocation4 [shape = 'u8[512]{0}', space=smem, size = 0x200, scoped, tag = 'prefetched SMEM operand 0']
  %s0 = inlined_call_operand.vmem [shape: s32[5], index: 0, kind: input, shape index: {}]
  %s1 = inlined_call_operand.vmem [shape: bf16[16,128], index: 1, kind: input, shape index: {}]
  %s2 = inlined_call_operand.hbm [shape: bf16[5,1,128,768], index: 2, kind: input, shape index: {}]
  %s3 = inlined_call_operand.hbm [shape: bf16[5,1,384,128], index: 3, kind: input, shape index: {}]
  %s4 = inlined_call_operand.vmem [shape: f32[5,16,1], index: 4, kind: input, shape index: {}]
  %s5 = inlined_call_operand.hbm [shape: f32[16,128], index: 5, kind: output, shape index: {}]
  %s6 = sld [smem:[#allocation0]]
  $region69: #{tpu_custom_call.1} parent=0
    _
  %s8 = ssub.s32 1, %s6
  %s9 = scalar_select 0, %s8, %s6
  %s11 = sshll.u32 %s0, 4
  %s12 = int_to_ptr.vmem [resolvable:$true] %s11
  %14 = dma.vmem_to_smem %s12, 16, [#allocation4], [#allocation3]
  %16 = dma.done [#allocation3], 16
  %17 = sfence
  $region1: #{tpu_custom_call.1} parent=0
    #allocation5 [shape = 'u8[393216]{0}', space=vmem, size = 0x60000, scoped, tag = 'input window, operand 2']
    #allocation6 [shape = 's32[2]{0}', space=sflag, size = 0x8, scoped, tag = 'scoped memory for tpu_custom_call.1']
    #allocation7 [shape = 's32[2]{0}', space=sflag, size = 0x8, scoped, tag = 'scoped memory for tpu_custom_call.1']
    #allocation8 [shape = 'u8[196608]{0}', space=vmem, size = 0x30000, scoped, tag = 'input window, operand 3']
    #allocation9 [shape = 's32[2]{0}', space=sflag, size = 0x8, scoped, tag = 'scoped memory for tpu_custom_call.1']
    #allocation10 [shape = 'u8[8192]{0}', space=vmem, size = 0x2000, scoped, tag = 'output window, operand 0, single buffered']
    %18 = vsyncpa [#allocation6], 0
    %s19 = scalar_lea.sflag [#allocation6], 1
    %20 = vsyncpa %s19, 0
    %21 = vsyncpa [#allocation9], 0
    %s22 = scalar_lea.sflag [#allocation9], 1
    %23 = vsyncpa %s22, 0
    %24 = vsyncpa [#allocation7], 0
    loop: start=0, step=1, limit=7
    $region2: #{tpu_custom_call.1} parent=1 // loop_pre_header
      _
    $region3: #{tpu_custom_call.1} parent=1 // loop_header
      %s26 = sphi 0, %s30
      %p27 = scmp.ge.s32.totalorder %s26, 7
      %s33 = sphi 0, %s52
      %s34 = sphi 0, %s48
      %s35 = sphi 0, %s44
      %s36 = sphi 0, %s33
      %s37 = sphi 0, %s34
      %s38 = sphi 0, %s35
      %s39 = sphi 0, %s36
      %s40 = sphi 0, %s37
      %s41 = sphi 0, %s38
      %s55 = sphi 0, %s57
      %s58 = sphi 0, %s55
      %s59 = sphi 0, %s58
      %s75 = sphi 0, %s59
      %s83 = sphi 0, %s85
      %s86 = sphi 0, %s83
      %s87 = sphi 0, %s86
      %s103 = sphi 0, %s87
      %s111 = sphi 0, %s113
      %s114 = sphi 0, %s111
      %s115 = sphi 0, %s114
      %s131 = sphi 0, %s115
      %s139 = sphi 0, %s141
      %s142 = sphi 0, %s139
      %s143 = sphi 0, %s142
      %s159 = sphi 0, %s143
      %s165 = sphi 0, %s167
      %s168 = sphi 0, %s165
      %s169 = sphi 0, %s168
      %s185 = sphi 0, %s169
    $region4: #{tpu_custom_call.1} parent=1 // loop_header_branch
      %29 = sbr.rel (%p27) target = $region8
    $region5: #{tpu_custom_call.1} parent=1 // loop_body
      %s31 = ssub.s32 %s26, 1
      %s32 = ssub.s32 %s26, 2
      %s42 = sadd.s32 1, %s35
      %p43 = scmp.ge.s32.totalorder %s42, 1
      %s44 = scalar_select %p43, 0, %s42
      %s45 = sadd.s32 1, %s34
      %s46 = scalar_select %p43, %s45, %s34
      %p47 = scmp.ge.s32.totalorder %s46, 5
      %s48 = scalar_select %p47, 0, %s46
      %s49 = sadd.s32 1, %s33
      %s50 = scalar_select %p47, %s49, %s33
      %p51 = scmp.ge.s32.totalorder %s50, 1
      %s52 = scalar_select %p51, 0, %s50
      %s53 = ssub.s32 %s33, %s52
      %p54 = scmp.eq.s32.totalorder %s53, 0
      %s56 = sadd.s32 %s55, 1
      %s57 = scalar_select %p54, %s55, %s56
      %p60 = pneg %p54
      %p61 = scmp.eq.s32.totalorder %s26, 4
      %p62 = por %p60, %p61
      %p63 = scmp.ne.s32.totalorder %s55, %s58
      %p64 = scmp.eq.s32.totalorder %s26, 0
      %p65 = por %p63, %p64
      %p66 = scmp.ne.s32.totalorder %s55, %s58
      %p67 = scmp.eq.s32.totalorder %s31, 4
      %p68 = por %p66, %p67
      %p69 = scmp.ne.s32.totalorder %s58, %s59
      %p70 = scmp.eq.s32.totalorder %s31, 0
      %p71 = por %p69, %p70
      %p72 = scmp.ne.s32.totalorder %s58, %s59
      %p73 = scmp.eq.s32.totalorder %s32, 4
      %p74 = por %p72, %p73
      %p76 = scmp.ne.s32.totalorder %s59, %s75
      %p77 = scmp.eq.s32.totalorder %s32, 0
      %p78 = por %p76, %p77
      %s79 = ssub.s32 %s34, %s48
      %s80 = ssub.s32 %s35, %s44
      %s81 = sor.u32 %s79, %s80
      %p82 = scmp.eq.s32.totalorder %s81, 0
      %s84 = sadd.s32 %s83, 1
      %s85 = scalar_select %p82, %s83, %s84
      %p88 = pneg %p82
      %p89 = scmp.eq.s32.totalorder %s26, 4
      %p90 = por %p88, %p89
      %p91 = scmp.ne.s32.totalorder %s83, %s86
      %p92 = scmp.eq.s32.totalorder %s26, 0
      %p93 = por %p91, %p92
      %p94 = scmp.ne.s32.totalorder %s83, %s86
      %p95 = scmp.eq.s32.totalorder %s31, 4
      %p96 = por %p94, %p95
      %p97 = scmp.ne.s32.totalorder %s86, %s87
      %p98 = scmp.eq.s32.totalorder %s31, 0
      %p99 = por %p97, %p98
      %p100 = scmp.ne.s32.totalorder %s86, %s87
      %p101 = scmp.eq.s32.totalorder %s32, 4
      %p102 = por %p100, %p101
      %p104 = scmp.ne.s32.totalorder %s87, %s103
      %p105 = scmp.eq.s32.totalorder %s32, 0
      %p106 = por %p104, %p105
      %s107 = ssub.s32 %s34, %s48
      %s108 = ssub.s32 %s35, %s44
      %s109 = sor.u32 %s107, %s108
      %p110 = scmp.eq.s32.totalorder %s109, 0
      %s112 = sadd.s32 %s111, 1
      %s113 = scalar_select %p110, %s111, %s112
      %p116 = pneg %p110
      %p117 = scmp.eq.s32.totalorder %s26, 4
      %p118 = por %p116, %p117
      %p119 = scmp.ne.s32.totalorder %s111, %s114
      %p120 = scmp.eq.s32.totalorder %s26, 0
      %p121 = por %p119, %p120
      %p122 = scmp.ne.s32.totalorder %s111, %s114
      %p123 = scmp.eq.s32.totalorder %s31, 4
      %p124 = por %p122, %p123
      %p125 = scmp.ne.s32.totalorder %s114, %s115
      %p126 = scmp.eq.s32.totalorder %s31, 0
      %p127 = por %p125, %p126
      %p128 = scmp.ne.s32.totalorder %s114, %s115
      %p129 = scmp.eq.s32.totalorder %s32, 4
      %p130 = por %p128, %p129
      %p132 = scmp.ne.s32.totalorder %s115, %s131
      %p133 = scmp.eq.s32.totalorder %s32, 0
      %p134 = por %p132, %p133
      %s135 = ssub.s32 %s34, %s48
      %s136 = ssub.s32 %s33, %s52
      %s137 = sor.u32 %s135, %s136
      %p138 = scmp.eq.s32.totalorder %s137, 0
      %s140 = sadd.s32 %s139, 1
      %s141 = scalar_select %p138, %s139, %s140
      %p144 = pneg %p138
      %p145 = scmp.eq.s32.totalorder %s26, 4
      %p146 = por %p144, %p145
      %p147 = scmp.ne.s32.totalorder %s139, %s142
      %p148 = scmp.eq.s32.totalorder %s26, 0
      %p149 = por %p147, %p148
      %p150 = scmp.ne.s32.totalorder %s139, %s142
      %p151 = scmp.eq.s32.totalorder %s31, 4
      %p152 = por %p150, %p151
      %p153 = scmp.ne.s32.totalorder %s142, %s143
      %p154 = scmp.eq.s32.totalorder %s31, 0
      %p155 = por %p153, %p154
      %p156 = scmp.ne.s32.totalorder %s142, %s143
      %p157 = scmp.eq.s32.totalorder %s32, 4
      %p158 = por %p156, %p157
      %p160 = scmp.ne.s32.totalorder %s143, %s159
      %p161 = scmp.eq.s32.totalorder %s32, 0
      %p162 = por %p160, %p161
      %s163 = ssub.s32 %s33, %s52
      %p164 = scmp.eq.s32.totalorder %s163, 0
      %s166 = sadd.s32 %s165, 1
      %s167 = scalar_select %p164, %s165, %s166
      %p170 = pneg %p164
      %p171 = scmp.eq.s32.totalorder %s26, 4
      %p172 = por %p170, %p171
      %p173 = scmp.ne.s32.totalorder %s165, %s168
      %p174 = scmp.eq.s32.totalorder %s26, 0
      %p175 = por %p173, %p174
      %p176 = scmp.ne.s32.totalorder %s165, %s168
      %p177 = scmp.eq.s32.totalorder %s31, 4
      %p178 = por %p176, %p177
      %p179 = scmp.ne.s32.totalorder %s168, %s169
      %p180 = scmp.eq.s32.totalorder %s31, 0
      %p181 = por %p179, %p180
      %p182 = scmp.ne.s32.totalorder %s168, %s169
      %p183 = scmp.eq.s32.totalorder %s32, 4
      %p184 = por %p182, %p183
      %p186 = scmp.ne.s32.totalorder %s169, %s185
      %p187 = scmp.eq.s32.totalorder %s32, 0
      %p188 = por %p186, %p187
      %p189 = scmp.le.s32.totalorder 1, %s26
      %p190 = scmp.lt.s32.totalorder %s26, 6
      %p191 = pnand %p189, %p190
      %p192 = pneg %p191
      // Predicated region
      $region9: #{tpu_custom_call.1} parent=5 // pred_check
        _
      $region10: #{tpu_custom_call.1} parent=5 // pred_check_branch
        %194 = sbr.rel (%p191) target = $region12
      $region11: #{tpu_custom_call.1} parent=5 // pred_region
        %s195 = ssub.s32 %s26, 1
        // Predicated region
        $region13: #{tpu_custom_call.1} parent=11 // pred_check
          %p196 = pneg %p71
        $region14: #{tpu_custom_call.1} parent=11 // pred_check_branch
          %198 = sbr.rel (%p196) target = $region16
        $region15: #{tpu_custom_call.1} parent=11 // pred_region
          %s199 = smul.u32 2, %s36
          %p200 = scmp.lt.s32.totalorder %s199, 1
          %s201 = scalar_select %p200, %s199, 1
          %s202 = smul.addr %s201, 4
          %s203 = scalar_lea.vmem %s1, %s202
          %s204 = smul.u32 2, %s36
        $region16: #{tpu_custom_call.1} parent=11 // pred_fallthru
          _
      $region12: #{tpu_custom_call.1} parent=5 // pred_fallthru
        _
      %p205 = scmp.lt.s32.totalorder %s26, 5
      // Predicated region
      $region17: #{tpu_custom_call.1} parent=5 // pred_check
        %p206 = pneg %p205
      $region18: #{tpu_custom_call.1} parent=5 // pred_check_branch
        %208 = sbr.rel (%p206) target = $region20
      $region19: #{tpu_custom_call.1} parent=5 // pred_region
        // Predicated region
        $region21: #{tpu_custom_call.1} parent=19 // pred_check
          %p209 = pneg %p93
        $region22: #{tpu_custom_call.1} parent=19 // pred_check_branch
          %211 = sbr.rel (%p209) target = $region24
        $region23: #{tpu_custom_call.1} parent=19 // pred_region
          %s212 = sand.u32 %s83, 1
          %s213 = scalar_lea.sflag [#allocation6], %s212
          %s214 = sand.u32 %s83, 1
          %s215 = smul.addr %s214, 384
          %s216 = scalar_lea.vmem [#allocation5], %s215
          %218 = vsyncadd %s213, 0
          %s219 = smul.addr %s35, 96
          %s220 = smul.addr %s34, 96
          %s221 = sadd.s32 %s219, %s220
          %s222 = smul.addr %s221, 4
          %s223 = scalar_lea.hbm %s2, %s222
          %s224 = sshll.u32 %s223, 4
          %s225 = int_to_ptr.hbm [resolvable:$true] %s224
          %s226 = sshll.u32 %s216, 4
          %s227 = int_to_ptr.vmem [resolvable:$true] %s226
          %232 = dma.hbm_to_vmem [thread:$0]  %s225, 6144, %s227, %s213, 384, 384, 24
        $region24: #{tpu_custom_call.1} parent=19 // pred_fallthru
          _
        // Predicated region
        $region25: #{tpu_custom_call.1} parent=19 // pred_check
          %p233 = pneg %p121
        $region26: #{tpu_custom_call.1} parent=19 // pred_check_branch
          %235 = sbr.rel (%p233) target = $region28
        $region27: #{tpu_custom_call.1} parent=19 // pred_region
          %s236 = sand.u32 %s111, 1
          %s237 = scalar_lea.sflag [#allocation9], %s236
          %s238 = sand.u32 %s111, 1
          %s239 = smul.addr %s238, 192
          %s240 = scalar_lea.vmem [#allocation8], %s239
          %242 = vsyncadd %s237, 0
          %s243 = smul.addr %s35, 48
          %s244 = smul.addr %s34, 48
          %s245 = sadd.s32 %s243, %s244
          %s246 = smul.addr %s245, 4
          %s247 = scalar_lea.hbm %s3, %s246
          %s248 = sshll.u32 %s247, 4
          %s249 = int_to_ptr.hbm [resolvable:$true] %s248
          %s250 = sshll.u32 %s240, 4
          %s251 = int_to_ptr.vmem [resolvable:$true] %s250
          %256 = dma.hbm_to_vmem [thread:$0]  %s249, 3072, %s251, %s237, 64, 64, 4
        $region28: #{tpu_custom_call.1} parent=19 // pred_fallthru
          _
        // Predicated region
        $region29: #{tpu_custom_call.1} parent=19 // pred_check
          %p257 = pneg %p149
        $region30: #{tpu_custom_call.1} parent=19 // pred_check_branch
          %259 = sbr.rel (%p257) target = $region32
        $region31: #{tpu_custom_call.1} parent=19 // pred_region
          %s260 = smul.u32 2, %s33
          %p261 = scmp.lt.s32.totalorder %s34, 4
          %s262 = scalar_select %p261, %s34, 4
          %p263 = scmp.lt.s32.totalorder %s260, 1
          %s264 = scalar_select %p263, %s260, 1
          %s265 = smul.addr %s262, 2
          %s266 = sadd.s32 %s264, %s265
          %s267 = smul.addr %s266, 8
          %s268 = scalar_lea.vmem %s4, %s267
          %s269 = smul.u32 2, %s33
        $region32: #{tpu_custom_call.1} parent=19 // pred_fallthru
          _
      $region20: #{tpu_custom_call.1} parent=5 // pred_fallthru
        _
      %p270 = scmp.le.s32.totalorder 1, %s26
      %p271 = scmp.lt.s32.totalorder %s26, 6
      %p272 = pnand %p270, %p271
      %p273 = pneg %p272
      // Predicated region
      $region33: #{tpu_custom_call.1} parent=5 // pred_check
        _
      $region34: #{tpu_custom_call.1} parent=5 // pred_check_branch
        %275 = sbr.rel (%p272) target = $region36
      $region35: #{tpu_custom_call.1} parent=5 // pred_region
        %s276 = ssub.s32 %s26, 1
        %s277 = sand.u32 %s86, 1
        %s278 = scalar_lea.sflag [#allocation6], %s277
        %s279 = sand.u32 %s86, 1
        %s280 = smul.addr %s279, 384
        %s281 = scalar_lea.vmem [#allocation5], %s280
        // Predicated region
        $region37: #{tpu_custom_call.1} parent=35 // pred_check
          %p282 = pneg %p99
        $region38: #{tpu_custom_call.1} parent=35 // pred_check_branch
          %284 = sbr.rel (%p282) target = $region40
        $region39: #{tpu_custom_call.1} parent=35 // pred_region
          %286 = dma.done %s278, 6144
        $region40: #{tpu_custom_call.1} parent=35 // pred_fallthru
          _
        %s287 = sand.u32 %s114, 1
        %s288 = scalar_lea.sflag [#allocation9], %s287
        %s289 = sand.u32 %s114, 1
        %s290 = smul.addr %s289, 192
        %s291 = scalar_lea.vmem [#allocation8], %s290
        // Predicated region
        $region41: #{tpu_custom_call.1} parent=35 // pred_check
          %p292 = pneg %p127
        $region42: #{tpu_custom_call.1} parent=35 // pred_check_branch
          %294 = sbr.rel (%p292) target = $region44
        $region43: #{tpu_custom_call.1} parent=35 // pred_region
          %296 = dma.done %s288, 3072
        $region44: #{tpu_custom_call.1} parent=35 // pred_fallthru
          _
        %s297 = smul.u32 2, %s36
        %p298 = scmp.lt.s32.totalorder %s297, 1
        %s299 = scalar_select %p298, %s297, 1
        %s300 = smul.addr %s299, 4
        %s301 = scalar_lea.vmem %s1, %s300
        %p302 = pneg %p71
        %p303 = pneg %p68
        %s304 = sand.u32 %s86, 1
        %s305 = scalar_lea.sflag [#allocation6], %s304
        %s306 = sand.u32 %s86, 1
        %s307 = smul.addr %s306, 384
        %s308 = scalar_lea.vmem [#allocation5], %s307
        %p309 = pneg %p99
        %p310 = pneg %p96
        %s311 = sand.u32 %s114, 1
        %s312 = scalar_lea.sflag [#allocation9], %s311
        %s313 = sand.u32 %s114, 1
        %s314 = smul.addr %s313, 192
        %s315 = scalar_lea.vmem [#allocation8], %s314
        %p316 = pneg %p127
        %p317 = pneg %p124
        %s318 = smul.u32 2, %s36
        %p319 = scmp.lt.s32.totalorder %s37, 4
        %s320 = scalar_select %p319, %s37, 4
        %p321 = scmp.lt.s32.totalorder %s318, 1
        %s322 = scalar_select %p321, %s318, 1
        %s323 = smul.addr %s320, 2
        %s324 = sadd.s32 %s322, %s323
        %s325 = smul.addr %s324, 8
        %s326 = scalar_lea.vmem %s4, %s325
        %p327 = pneg %p155
        %p328 = pneg %p152
        %p329 = pneg %p181
        %p330 = pneg %p178
        %s331 = smul.u32 2, %s36
        %p332 = scmp.lt.s32.totalorder %s331, 1
        %s333 = scalar_select %p332, %s331, 1
        %s334 = smul.addr %s333, 4
        %s335 = scalar_lea.vmem %s1, %s334
        %s336 = smul.u32 2, %s36
        %s337 = smul.u32 2, %s36
        %p338 = scmp.lt.s32.totalorder %s37, 4
        %s339 = scalar_select %p338, %s37, 4
        %p340 = scmp.lt.s32.totalorder %s337, 1
        %s341 = scalar_select %p340, %s337, 1
        %s342 = smul.addr %s339, 2
        %s343 = sadd.s32 %s341, %s342
        %s344 = smul.addr %s343, 8
        %s345 = scalar_lea.vmem %s4, %s344
        %s346 = smul.u32 2, %s36
        %s347 = smul.u32 2, %s36
        %p348 = scmp.eq.s32.totalorder %s37, 0
        %p349 = scmp.eq.s32.totalorder %s38, 0
        %p350 = pnand %p348, %p349
        %p351 = pneg %p350
        // Predicated region
        $region45: #{tpu_custom_call.1} parent=35 // pred_check
          _
        $region46: #{tpu_custom_call.1} parent=35 // pred_check_branch
          %353 = sbr.rel (%p350) target = $region48
        $region47: #{tpu_custom_call.1} parent=35 // pred_region
          %354 = vst [vmem:[#allocation2] sm:$0xff] 0.0
          %355 = vst [vmem:[#allocation2 + $0x8] sm:$0xff] 0.0
        $region48: #{tpu_custom_call.1} parent=35 // pred_fallthru
          _
        %s356 = smul.u32 %s36, 5
        %s357 = sadd.s32 %s356, %s37
        %s358 = sld [smem:[#allocation4 + %s357]]
        %p359 = scmp.gt.s32.totalorder %s358, 0
        // Predicated region
        $region49: #{tpu_custom_call.1} parent=35 // pred_check
          %p360 = pneg %p359
        $region50: #{tpu_custom_call.1} parent=35 // pred_check_branch
          %362 = sbr.rel (%p360) target = $region52
        $region51: #{tpu_custom_call.1} parent=35 // pred_region
          %v363 = vld [vmem:[%s335] sm:$0xf]
          %v364 = vld [vmem:[%s335 + $0x4] sm:$0xf]
          %v365 = vld [vmem:[%s281] sm:$0xff]
          %v366 = vld [vmem:[%s281 + $0x8] sm:$0xff]
          %v367 = vld [vmem:[%s281 + $0x10] sm:$0xff]
          %v368 = vld [vmem:[%s281 + $0x18] sm:$0xff]
          %v369 = vld [vmem:[%s281 + $0x20] sm:$0xff]
          %v370 = vld [vmem:[%s281 + $0x28] sm:$0xff]
          %v371 = vld [vmem:[%s281 + $0x30] sm:$0xff]
          %v372 = vld [vmem:[%s281 + $0x38] sm:$0xff]
          %v373 = vld [vmem:[%s281 + $0x40] sm:$0xff]
          %v374 = vld [vmem:[%s281 + $0x48] sm:$0xff]
          %v375 = vld [vmem:[%s281 + $0x50] sm:$0xff]
          %v376 = vld [vmem:[%s281 + $0x58] sm:$0xff]
          %v377 = vld [vmem:[%s281 + $0x60] sm:$0xff]
          %v378 = vld [vmem:[%s281 + $0x68] sm:$0xff]
          %v379 = vld [vmem:[%s281 + $0x70] sm:$0xff]
          %v380 = vld [vmem:[%s281 + $0x78] sm:$0xff]
          %v381 = vld [vmem:[%s281 + $0x80] sm:$0xff]
          %v382 = vld [vmem:[%s281 + $0x88] sm:$0xff]
          %v383 = vld [vmem:[%s281 + $0x90] sm:$0xff]
          %v384 = vld [vmem:[%s281 + $0x98] sm:$0xff]
          %v385 = vld [vmem:[%s281 + $0xa0] sm:$0xff]
          %v386 = vld [vmem:[%s281 + $0xa8] sm:$0xff]
          %v387 = vld [vmem:[%s281 + $0xb0] sm:$0xff]
          %v388 = vld [vmem:[%s281 + $0xb8] sm:$0xff]
          %v389 = vld [vmem:[%s281 + $0xc0] sm:$0xff]
          %v390 = vld [vmem:[%s281 + $0xc8] sm:$0xff]
          %v391 = vld [vmem:[%s281 + $0xd0] sm:$0xff]
          %v392 = vld [vmem:[%s281 + $0xd8] sm:$0xff]
          %v393 = vld [vmem:[%s281 + $0xe0] sm:$0xff]
          %v394 = vld [vmem:[%s281 + $0xe8] sm:$0xff]
          %v395 = vld [vmem:[%s281 + $0xf0] sm:$0xff]
          %v396 = vld [vmem:[%s281 + $0xf8] sm:$0xff]
          %v397 = vld [vmem:[%s281 + $0x100] sm:$0xff]
          %v398 = vld [vmem:[%s281 + $0x108] sm:$0xff]
          %v399 = vld [vmem:[%s281 + $0x110] sm:$0xff]
          %v400 = vld [vmem:[%s281 + $0x118] sm:$0xff]
          %v401 = vld [vmem:[%s281 + $0x120] sm:$0xff]
          %v402 = vld [vmem:[%s281 + $0x128] sm:$0xff]
          %v403 = vld [vmem:[%s281 + $0x130] sm:$0xff]
          %v404 = vld [vmem:[%s281 + $0x138] sm:$0xff]
          %v405 = vld [vmem:[%s281 + $0x140] sm:$0xff]
          %v406 = vld [vmem:[%s281 + $0x148] sm:$0xff]
          %v407 = vld [vmem:[%s281 + $0x150] sm:$0xff]
          %v408 = vld [vmem:[%s281 + $0x158] sm:$0xff]
          %v409 = vld [vmem:[%s281 + $0x160] sm:$0xff]
          %v410 = vld [vmem:[%s281 + $0x168] sm:$0xff]
          %v411 = vld [vmem:[%s281 + $0x170] sm:$0xff]
          %v412 = vld [vmem:[%s281 + $0x178] sm:$0xff]
          %v415 = vunpack.c.l.b16 %v363
          %v416 = vunpack.c.l.b16 %v364
          %v417 = vpack.c.b16 %v416, %v415
          %v467 = vunpack.c.l.b16 %v365
          %v468 = vunpack.c.h.b16 %v365
          %v469 = vunpack.c.l.b16 %v366
          %v470 = vunpack.c.h.b16 %v366
          %v471 = vunpack.c.l.b16 %v367
          %v472 = vunpack.c.h.b16 %v367
          %v473 = vunpack.c.l.b16 %v368
          %v474 = vunpack.c.h.b16 %v368
          %v475 = vunpack.c.l.b16 %v369
          %v476 = vunpack.c.h.b16 %v369
          %v477 = vunpack.c.l.b16 %v370
          %v478 = vunpack.c.h.b16 %v370
          %v479 = vunpack.c.l.b16 %v371
          %v480 = vunpack.c.h.b16 %v371
          %v481 = vunpack.c.l.b16 %v372
          %v482 = vunpack.c.h.b16 %v372
          %v483 = vunpack.c.l.b16 %v373
          %v484 = vunpack.c.h.b16 %v373
          %v485 = vunpack.c.l.b16 %v374
          %v486 = vunpack.c.h.b16 %v374
          %v487 = vunpack.c.l.b16 %v375
          %v488 = vunpack.c.h.b16 %v375
          %v489 = vunpack.c.l.b16 %v376
          %v490 = vunpack.c.h.b16 %v376
          %v491 = vunpack.c.l.b16 %v377
          %v492 = vunpack.c.h.b16 %v377
          %v493 = vunpack.c.l.b16 %v378
          %v494 = vunpack.c.h.b16 %v378
          %v495 = vunpack.c.l.b16 %v379
          %v496 = vunpack.c.h.b16 %v379
          %v497 = vunpack.c.l.b16 %v380
          %v498 = vunpack.c.h.b16 %v380
          %v499 = vunpack.c.l.b16 %v381
          %v500 = vunpack.c.h.b16 %v381
          %v501 = vunpack.c.l.b16 %v382
          %v502 = vunpack.c.h.b16 %v382
          %v503 = vunpack.c.l.b16 %v383
          %v504 = vunpack.c.h.b16 %v383
          %v505 = vunpack.c.l.b16 %v384
          %v506 = vunpack.c.h.b16 %v384
          %v507 = vunpack.c.l.b16 %v385
          %v508 = vunpack.c.h.b16 %v385
          %v509 = vunpack.c.l.b16 %v386
          %v510 = vunpack.c.h.b16 %v386
          %v511 = vunpack.c.l.b16 %v387
          %v512 = vunpack.c.h.b16 %v387
          %v513 = vunpack.c.l.b16 %v388
          %v514 = vunpack.c.h.b16 %v388
          %v515 = vunpack.c.l.b16 %v389
          %v516 = vunpack.c.h.b16 %v389
          %v517 = vunpack.c.l.b16 %v390
          %v518 = vunpack.c.h.b16 %v390
          %v519 = vunpack.c.l.b16 %v391
          %v520 = vunpack.c.h.b16 %v391
          %v521 = vunpack.c.l.b16 %v392
          %v522 = vunpack.c.h.b16 %v392
          %v523 = vunpack.c.l.b16 %v393
          %v524 = vunpack.c.h.b16 %v393
          %v525 = vunpack.c.l.b16 %v394
          %v526 = vunpack.c.h.b16 %v394
          %v527 = vunpack.c.l.b16 %v395
          %v528 = vunpack.c.h.b16 %v395
          %v529 = vunpack.c.l.b16 %v396
          %v530 = vunpack.c.h.b16 %v396
          %v531 = vunpack.c.l.b16 %v397
          %v532 = vunpack.c.h.b16 %v397
          %v533 = vunpack.c.l.b16 %v398
          %v534 = vunpack.c.h.b16 %v398
          %v535 = vunpack.c.l.b16 %v399
          %v536 = vunpack.c.h.b16 %v399
          %v537 = vunpack.c.l.b16 %v400
          %v538 = vunpack.c.h.b16 %v400
          %v539 = vunpack.c.l.b16 %v401
          %v540 = vunpack.c.h.b16 %v401
          %v541 = vunpack.c.l.b16 %v402
          %v542 = vunpack.c.h.b16 %v402
          %v543 = vunpack.c.l.b16 %v403
          %v544 = vunpack.c.h.b16 %v403
          %v545 = vunpack.c.l.b16 %v404
          %v546 = vunpack.c.h.b16 %v404
          %v547 = vunpack.c.l.b16 %v405
          %v548 = vunpack.c.h.b16 %v405
          %v549 = vunpack.c.l.b16 %v406
          %v550 = vunpack.c.h.b16 %v406
          %v551 = vunpack.c.l.b16 %v407
          %v552 = vunpack.c.h.b16 %v407
          %v553 = vunpack.c.l.b16 %v408
          %v554 = vunpack.c.h.b16 %v408
          %v555 = vunpack.c.l.b16 %v409
          %v556 = vunpack.c.h.b16 %v409
          %v557 = vunpack.c.l.b16 %v410
          %v558 = vunpack.c.h.b16 %v410
          %v559 = vunpack.c.l.b16 %v411
          %v560 = vunpack.c.h.b16 %v411
          %v561 = vunpack.c.l.b16 %v412
          %v562 = vunpack.c.h.b16 %v412
          %v563 = vpack.c.b16 %v473, %v467
          %v564 = vpack.c.b16 %v474, %v468
          %v565 = vpack.c.b16 %v475, %v469
          %v566 = vpack.c.b16 %v476, %v470
          %v567 = vpack.c.b16 %v477, %v471
          %v568 = vpack.c.b16 %v478, %v472
          %v569 = vpack.c.b16 %v485, %v479
          %v570 = vpack.c.b16 %v486, %v480
          %v571 = vpack.c.b16 %v487, %v481
          %v572 = vpack.c.b16 %v488, %v482
          %v573 = vpack.c.b16 %v489, %v483
          %v574 = vpack.c.b16 %v490, %v484
          %v575 = vpack.c.b16 %v497, %v491
          %v576 = vpack.c.b16 %v498, %v492
          %v577 = vpack.c.b16 %v499, %v493
          %v578 = vpack.c.b16 %v500, %v494
          %v579 = vpack.c.b16 %v501, %v495
          %v580 = vpack.c.b16 %v502, %v496
          %v581 = vpack.c.b16 %v509, %v503
          %v582 = vpack.c.b16 %v510, %v504
          %v583 = vpack.c.b16 %v511, %v505
          %v584 = vpack.c.b16 %v512, %v506
          %v585 = vpack.c.b16 %v513, %v507
          %v586 = vpack.c.b16 %v514, %v508
          %v587 = vpack.c.b16 %v521, %v515
          %v588 = vpack.c.b16 %v522, %v516
          %v589 = vpack.c.b16 %v523, %v517
          %v590 = vpack.c.b16 %v524, %v518
          %v591 = vpack.c.b16 %v525, %v519
          %v592 = vpack.c.b16 %v526, %v520
          %v593 = vpack.c.b16 %v533, %v527
          %v594 = vpack.c.b16 %v534, %v528
          %v595 = vpack.c.b16 %v535, %v529
          %v596 = vpack.c.b16 %v536, %v530
          %v597 = vpack.c.b16 %v537, %v531
          %v598 = vpack.c.b16 %v538, %v532
          %v599 = vpack.c.b16 %v545, %v539
          %v600 = vpack.c.b16 %v546, %v540
          %v601 = vpack.c.b16 %v547, %v541
          %v602 = vpack.c.b16 %v548, %v542
          %v603 = vpack.c.b16 %v549, %v543
          %v604 = vpack.c.b16 %v550, %v544
          %v605 = vpack.c.b16 %v557, %v551
          %v606 = vpack.c.b16 %v558, %v552
          %v607 = vpack.c.b16 %v559, %v553
          %v608 = vpack.c.b16 %v560, %v554
          %v609 = vpack.c.b16 %v561, %v555
          %v610 = vpack.c.b16 %v562, %v556
          %659 = vmatpush.bf16.msra.mxu0 %v605
          %660 = vmatpush.bf16.msra.mxu0 %v599
          %661 = vmatpush.bf16.msra.mxu0 %v593
          %662 = vmatpush.bf16.msra.mxu0 %v587
          %663 = vmatpush.bf16.msra.mxu0 %v581
          %664 = vmatpush.bf16.msra.mxu0 %v575
          %665 = vmatpush.bf16.msra.mxu0 %v569
          %666 = vmatpush.bf16.msra.mxu0 %v563
          %667 = vmatmul.bf16.gmra.mxu0 %v417
          %v668 = vpop.f32.mrf.mxu0
          %v669 = vadd.f32 0.0, %v668
          %v670 = vpop.f32.mrf.mxu0
          %v671 = vadd.f32 0.0, %v670
          %672 = vdwg.mxu0
          %673 = vmatpush.bf16.msra.mxu0 %v606
          %674 = vmatpush.bf16.msra.mxu0 %v600
          %675 = vmatpush.bf16.msra.mxu0 %v594
          %676 = vmatpush.bf16.msra.mxu0 %v588
          %677 = vmatpush.bf16.msra.mxu0 %v582
          %678 = vmatpush.bf16.msra.mxu0 %v576
          %679 = vmatpush.bf16.msra.mxu0 %v570
          %680 = vmatpush.bf16.msra.mxu0 %v564
          %681 = vmatmul.bf16.gmra.mxu0 %v417
          %v682 = vpop.f32.mrf.mxu0
          %v683 = vadd.f32 0.0, %v682
          %v684 = vpop.f32.mrf.mxu0
          %v685 = vadd.f32 0.0, %v684
          %686 = vdwg.mxu0
          %687 = vmatpush.bf16.msra.mxu0 %v607
          %688 = vmatpush.bf16.msra.mxu0 %v601
          %689 = vmatpush.bf16.msra.mxu0 %v595
          %690 = vmatpush.bf16.msra.mxu0 %v589
          %691 = vmatpush.bf16.msra.mxu0 %v583
          %692 = vmatpush.bf16.msra.mxu0 %v577
          %693 = vmatpush.bf16.msra.mxu0 %v571
          %694 = vmatpush.bf16.msra.mxu0 %v565
          %695 = vmatmul.bf16.gmra.mxu0 %v417
          %v696 = vpop.f32.mrf.mxu0
          %v697 = vadd.f32 0.0, %v696
          %v698 = vpop.f32.mrf.mxu0
          %v699 = vadd.f32 0.0, %v698
          %700 = vdwg.mxu0
          %701 = vmatpush.bf16.msra.mxu0 %v608
          %702 = vmatpush.bf16.msra.mxu0 %v602
          %703 = vmatpush.bf16.msra.mxu0 %v596
          %704 = vmatpush.bf16.msra.mxu0 %v590
          %705 = vmatpush.bf16.msra.mxu0 %v584
          %706 = vmatpush.bf16.msra.mxu0 %v578
          %707 = vmatpush.bf16.msra.mxu0 %v572
          %708 = vmatpush.bf16.msra.mxu0 %v566
          %709 = vmatmul.bf16.gmra.mxu0 %v417
          %v710 = vpop.f32.mrf.mxu0
          %v711 = vadd.f32 0.0, %v710
          %v712 = vpop.f32.mrf.mxu0
          %v713 = vadd.f32 0.0, %v712
          %714 = vdwg.mxu0
          %715 = vmatpush.bf16.msra.mxu0 %v609
          %716 = vmatpush.bf16.msra.mxu0 %v603
          %717 = vmatpush.bf16.msra.mxu0 %v597
          %718 = vmatpush.bf16.msra.mxu0 %v591
          %719 = vmatpush.bf16.msra.mxu0 %v585
          %720 = vmatpush.bf16.msra.mxu0 %v579
          %721 = vmatpush.bf16.msra.mxu0 %v573
          %722 = vmatpush.bf16.msra.mxu0 %v567
          %723 = vmatmul.bf16.gmra.mxu0 %v417
          %v724 = vpop.f32.mrf.mxu0
          %v725 = vadd.f32 0.0, %v724
          %v726 = vpop.f32.mrf.mxu0
          %v727 = vadd.f32 0.0, %v726
          %728 = vdwg.mxu0
          %729 = vmatpush.bf16.msra.mxu0 %v610
          %730 = vmatpush.bf16.msra.mxu0 %v604
          %731 = vmatpush.bf16.msra.mxu0 %v598
          %732 = vmatpush.bf16.msra.mxu0 %v592
          %733 = vmatpush.bf16.msra.mxu0 %v586
          %734 = vmatpush.bf16.msra.mxu0 %v580
          %735 = vmatpush.bf16.msra.mxu0 %v574
          %736 = vmatpush.bf16.msra.mxu0 %v568
          %737 = vmatmul.bf16.gmra.mxu0 %v417
          %v738 = vpop.f32.mrf.mxu0
          %v739 = vadd.f32 0.0, %v738
          %v740 = vpop.f32.mrf.mxu0
          %v741 = vadd.f32 0.0, %v740
          %742 = vdwg.mxu0
          %v743 = vsub.f32 0.0, %v669
          %v744 = vsub.f32 0.0, %v683
          %v745 = vsub.f32 0.0, %v697
          %v746 = vsub.f32 0.0, %v671
          %v747 = vsub.f32 0.0, %v685
          %v748 = vsub.f32 0.0, %v699
          %v749 = vmul.f32 %v743, 1.442695
          %v750 = vpow.pop %v749
          %v751 = vmul.f32 %v744, 1.442695
          %v752 = vpow.pop %v751
          %v753 = vmul.f32 %v745, 1.442695
          %v754 = vpow.pop %v753
          %v755 = vmul.f32 %v746, 1.442695
          %v756 = vpow.pop %v755
          %v757 = vmul.f32 %v747, 1.442695
          %v758 = vpow.pop %v757
          %v759 = vmul.f32 %v748, 1.442695
          %v760 = vpow.pop %v759
          %v761 = vadd.f32 %v750, 1.0
          %v762 = vadd.f32 %v752, 1.0
          %v763 = vadd.f32 %v754, 1.0
          %v764 = vadd.f32 %v756, 1.0
          %v765 = vadd.f32 %v758, 1.0
          %v766 = vadd.f32 %v760, 1.0
          %v767 = vrcp.pop %v761
          %v768 = vrcp.pop %v762
          %v769 = vrcp.pop %v763
          %v770 = vrcp.pop %v764
          %v771 = vrcp.pop %v765
          %v772 = vrcp.pop %v766
          %v773 = vmul.f32 %v669, %v767
          %v774 = vmul.f32 %v683, %v768
          %v775 = vmul.f32 %v697, %v769
          %v776 = vmul.f32 %v671, %v770
          %v777 = vmul.f32 %v685, %v771
          %v778 = vmul.f32 %v699, %v772
          %v779 = vmul.f32 %v773, %v711
          %v780 = vmul.f32 %v774, %v725
          %v781 = vmul.f32 %v775, %v739
          %v782 = vmul.f32 %v776, %v713
          %v783 = vmul.f32 %v777, %v727
          %v784 = vmul.f32 %v778, %v741
          %v785 = vpack.c.bf16 %v782, %v779
          %v786 = vpack.c.bf16 %v783, %v780
          %v787 = vpack.c.bf16 %v784, %v781
          %v788 = vld [vmem:[%s291] sm:$0xf]
          %v789 = vld [vmem:[%s291 + $0x4] sm:$0xf]
          %v790 = vld [vmem:[%s291 + $0x8] sm:$0xf]
          %v791 = vld [vmem:[%s291 + $0xc] sm:$0xf]
          %v792 = vld [vmem:[%s291 + $0x10] sm:$0xf]
          %v793 = vld [vmem:[%s291 + $0x14] sm:$0xf]
          %v794 = vld [vmem:[%s291 + $0x18] sm:$0xf]
          %v795 = vld [vmem:[%s291 + $0x1c] sm:$0xf]
          %v796 = vld [vmem:[%s291 + $0x20] sm:$0xf]
          %v797 = vld [vmem:[%s291 + $0x24] sm:$0xf]
          %v798 = vld [vmem:[%s291 + $0x28] sm:$0xf]
          %v799 = vld [vmem:[%s291 + $0x2c] sm:$0xf]
          %v800 = vld [vmem:[%s291 + $0x30] sm:$0xf]
          %v801 = vld [vmem:[%s291 + $0x34] sm:$0xf]
          %v802 = vld [vmem:[%s291 + $0x38] sm:$0xf]
          %v803 = vld [vmem:[%s291 + $0x3c] sm:$0xf]
          %v804 = vld [vmem:[%s291 + $0x40] sm:$0xf]
          %v805 = vld [vmem:[%s291 + $0x44] sm:$0xf]
          %v806 = vld [vmem:[%s291 + $0x48] sm:$0xf]
          %v807 = vld [vmem:[%s291 + $0x4c] sm:$0xf]
          %v808 = vld [vmem:[%s291 + $0x50] sm:$0xf]
          %v809 = vld [vmem:[%s291 + $0x54] sm:$0xf]
          %v810 = vld [vmem:[%s291 + $0x58] sm:$0xf]
          %v811 = vld [vmem:[%s291 + $0x5c] sm:$0xf]
          %v812 = vld [vmem:[%s291 + $0x60] sm:$0xf]
          %v813 = vld [vmem:[%s291 + $0x64] sm:$0xf]
          %v814 = vld [vmem:[%s291 + $0x68] sm:$0xf]
          %v815 = vld [vmem:[%s291 + $0x6c] sm:$0xf]
          %v816 = vld [vmem:[%s291 + $0x70] sm:$0xf]
          %v817 = vld [vmem:[%s291 + $0x74] sm:$0xf]
          %v818 = vld [vmem:[%s291 + $0x78] sm:$0xf]
          %v819 = vld [vmem:[%s291 + $0x7c] sm:$0xf]
          %v820 = vld [vmem:[%s291 + $0x80] sm:$0xf]
          %v821 = vld [vmem:[%s291 + $0x84] sm:$0xf]
          %v822 = vld [vmem:[%s291 + $0x88] sm:$0xf]
          %v823 = vld [vmem:[%s291 + $0x8c] sm:$0xf]
          %v824 = vld [vmem:[%s291 + $0x90] sm:$0xf]
          %v825 = vld [vmem:[%s291 + $0x94] sm:$0xf]
          %v826 = vld [vmem:[%s291 + $0x98] sm:$0xf]
          %v827 = vld [vmem:[%s291 + $0x9c] sm:$0xf]
          %v828 = vld [vmem:[%s291 + $0xa0] sm:$0xf]
          %v829 = vld [vmem:[%s291 + $0xa4] sm:$0xf]
          %v830 = vld [vmem:[%s291 + $0xa8] sm:$0xf]
          %v831 = vld [vmem:[%s291 + $0xac] sm:$0xf]
          %v832 = vld [vmem:[%s291 + $0xb0] sm:$0xf]
          %v833 = vld [vmem:[%s291 + $0xb4] sm:$0xf]
          %v834 = vld [vmem:[%s291 + $0xb8] sm:$0xf]
          %v835 = vld [vmem:[%s291 + $0xbc] sm:$0xf]
          %v884 = vunpack.c.l.b16 %v788
          %v885 = vunpack.c.l.b16 %v789
          %v886 = vunpack.c.l.b16 %v790
          %v887 = vunpack.c.l.b16 %v791
          %v888 = vunpack.c.l.b16 %v792
          %v889 = vunpack.c.l.b16 %v793
          %v890 = vunpack.c.l.b16 %v794
          %v891 = vunpack.c.l.b16 %v795
          %v892 = vunpack.c.l.b16 %v796
          %v893 = vunpack.c.l.b16 %v797
          %v894 = vunpack.c.l.b16 %v798
          %v895 = vunpack.c.l.b16 %v799
          %v896 = vunpack.c.l.b16 %v800
          %v897 = vunpack.c.l.b16 %v801
          %v898 = vunpack.c.l.b16 %v802
          %v899 = vunpack.c.l.b16 %v803
          %v900 = vunpack.c.l.b16 %v804
          %v901 = vunpack.c.l.b16 %v805
          %v902 = vunpack.c.l.b16 %v806
          %v903 = vunpack.c.l.b16 %v807
          %v904 = vunpack.c.l.b16 %v808
          %v905 = vunpack.c.l.b16 %v809
          %v906 = vunpack.c.l.b16 %v810
          %v907 = vunpack.c.l.b16 %v811
          %v908 = vunpack.c.l.b16 %v812
          %v909 = vunpack.c.l.b16 %v813
          %v910 = vunpack.c.l.b16 %v814
          %v911 = vunpack.c.l.b16 %v815
          %v912 = vunpack.c.l.b16 %v816
          %v913 = vunpack.c.l.b16 %v817
          %v914 = vunpack.c.l.b16 %v818
          %v915 = vunpack.c.l.b16 %v819
          %v916 = vunpack.c.l.b16 %v820
          %v917 = vunpack.c.l.b16 %v821
          %v918 = vunpack.c.l.b16 %v822
          %v919 = vunpack.c.l.b16 %v823
          %v920 = vunpack.c.l.b16 %v824
          %v921 = vunpack.c.l.b16 %v825
          %v922 = vunpack.c.l.b16 %v826
          %v923 = vunpack.c.l.b16 %v827
          %v924 = vunpack.c.l.b16 %v828
          %v925 = vunpack.c.l.b16 %v829
          %v926 = vunpack.c.l.b16 %v830
          %v927 = vunpack.c.l.b16 %v831
          %v928 = vunpack.c.l.b16 %v832
          %v929 = vunpack.c.l.b16 %v833
          %v930 = vunpack.c.l.b16 %v834
          %v931 = vunpack.c.l.b16 %v835
          %v932 = vpack.c.b16 %v885, %v884
          %v933 = vpack.c.b16 %v887, %v886
          %v934 = vpack.c.b16 %v889, %v888
          %v935 = vpack.c.b16 %v891, %v890
          %v936 = vpack.c.b16 %v893, %v892
          %v937 = vpack.c.b16 %v895, %v894
          %v938 = vpack.c.b16 %v897, %v896
          %v939 = vpack.c.b16 %v899, %v898
          %v940 = vpack.c.b16 %v901, %v900
          %v941 = vpack.c.b16 %v903, %v902
          %v942 = vpack.c.b16 %v905, %v904
          %v943 = vpack.c.b16 %v907, %v906
          %v944 = vpack.c.b16 %v909, %v908
          %v945 = vpack.c.b16 %v911, %v910
          %v946 = vpack.c.b16 %v913, %v912
          %v947 = vpack.c.b16 %v915, %v914
          %v948 = vpack.c.b16 %v917, %v916
          %v949 = vpack.c.b16 %v919, %v918
          %v950 = vpack.c.b16 %v921, %v920
          %v951 = vpack.c.b16 %v923, %v922
          %v952 = vpack.c.b16 %v925, %v924
          %v953 = vpack.c.b16 %v927, %v926
          %v954 = vpack.c.b16 %v929, %v928
          %v955 = vpack.c.b16 %v931, %v930
          %980 = vmatpush.bf16.msra.mxu0 %v939
          %981 = vmatpush.bf16.msra.mxu0 %v938
          %982 = vmatpush.bf16.msra.mxu0 %v937
          %983 = vmatpush.bf16.msra.mxu0 %v936
          %984 = vmatpush.bf16.msra.mxu0 %v935
          %985 = vmatpush.bf16.msra.mxu0 %v934
          %986 = vmatpush.bf16.msra.mxu0 %v933
          %987 = vmatpush.bf16.msra.mxu0 %v932
          %988 = vmatmul.bf16.gmra.mxu0 %v785
          %v989 = vpop.f32.mrf.mxu0
          %v990 = vadd.f32 0.0, %v989
          %v991 = vpop.f32.mrf.mxu0
          %v992 = vadd.f32 0.0, %v991
          %993 = vdwg.mxu0
          %994 = vmatpush.bf16.msra.mxu0 %v947
          %995 = vmatpush.bf16.msra.mxu0 %v946
          %996 = vmatpush.bf16.msra.mxu0 %v945
          %997 = vmatpush.bf16.msra.mxu0 %v944
          %998 = vmatpush.bf16.msra.mxu0 %v943
          %999 = vmatpush.bf16.msra.mxu0 %v942
          %1000 = vmatpush.bf16.msra.mxu0 %v941
          %1001 = vmatpush.bf16.msra.mxu0 %v940
          %1002 = vmatmul.bf16.gmra.mxu0 %v786
          %v1003 = vpop.f32.mrf.mxu0
          %v1004 = vadd.f32 %v990, %v1003
          %v1005 = vpop.f32.mrf.mxu0
          %v1006 = vadd.f32 %v992, %v1005
          %1007 = vdwg.mxu0
          %1008 = vmatpush.bf16.msra.mxu0 %v955
          %1009 = vmatpush.bf16.msra.mxu0 %v954
          %1010 = vmatpush.bf16.msra.mxu0 %v953
          %1011 = vmatpush.bf16.msra.mxu0 %v952
          %1012 = vmatpush.bf16.msra.mxu0 %v951
          %1013 = vmatpush.bf16.msra.mxu0 %v950
          %1014 = vmatpush.bf16.msra.mxu0 %v949
          %1015 = vmatpush.bf16.msra.mxu0 %v948
          %1016 = vmatmul.bf16.gmra.mxu0 %v787
          %v1017 = vpop.f32.mrf.mxu0
          %v1018 = vadd.f32 %v1004, %v1017
          %v1019 = vpop.f32.mrf.mxu0
          %v1020 = vadd.f32 %v1006, %v1019
          %1021 = vdwg.mxu0
          %v1022 = vld [vmem:[#allocation2] sm:$0xff]
          %v1023 = vld [vmem:[#allocation2 + $0x8] sm:$0xff]
          %v1024 = vld [vmem:[%s345] sm:$0xff]
          %v1025 = vld [vmem:[%s345 + $0x8] sm:$0xff]
          %1027 = vset.pattern.permute.xlu0 0
          %1028 = vperm.xlu0 %1027, %v1024
          %v1029 = vpop.permute.xlu0 %1028
          %1032 = vset.pattern.permute.xlu0 0
          %1033 = vperm.xlu0 %1032, %v1025
          %v1034 = vpop.permute.xlu0 %1033
          %v1036 = vmul.f32 %v1029, %v1018
          %v1037 = vmul.f32 %v1034, %v1020
          %v1038 = vadd.f32 %v1022, %v1036
          %v1039 = vadd.f32 %v1023, %v1037
          %1040 = vst [vmem:[#allocation2] sm:$0xff] %v1038
          %1041 = vst [vmem:[#allocation2 + $0x8] sm:$0xff] %v1039
        $region52: #{tpu_custom_call.1} parent=35 // pred_fallthru
          _
        %p1042 = scmp.eq.s32.totalorder %s37, 4
        %p1043 = pnand %p1042, %p349
        %p1044 = pneg %p1043
        // Predicated region
        $region53: #{tpu_custom_call.1} parent=35 // pred_check
          _
        $region54: #{tpu_custom_call.1} parent=35 // pred_check_branch
          %1046 = sbr.rel (%p1043) target = $region56
        $region55: #{tpu_custom_call.1} parent=35 // pred_region
          %v1047 = vld [vmem:[#allocation2] sm:$0xff]
          %v1048 = vld [vmem:[#allocation2 + $0x8] sm:$0xff]
          %1049 = vst [vmem:[#allocation10] sm:$0xff] %v1047
          %1050 = vst [vmem:[#allocation10 + $0x8] sm:$0xff] %v1048
        $region56: #{tpu_custom_call.1} parent=35 // pred_fallthru
          _
        // Predicated region
        $region57: #{tpu_custom_call.1} parent=35 // pred_check
          %p1051 = pneg %p178
        $region58: #{tpu_custom_call.1} parent=35 // pred_check_branch
          %1053 = sbr.rel (%p1051) target = $region60
        $region59: #{tpu_custom_call.1} parent=35 // pred_region
          %s1054 = smul.u32 2, %s36
          %1056 = vsyncadd [#allocation7], 0
          %s1057 = smul.addr %s1054, 8
          %s1058 = scalar_lea.hbm %s5, %s1057
          %s1059 = sshll.u32 [#allocation10], 4
          %s1060 = int_to_ptr.vmem [resolvable:$true] %s1059
          %s1061 = sshll.u32 %s1058, 4
          %s1062 = int_to_ptr.hbm [resolvable:$true] %s1061
          %1067 = dma.vmem_to_hbm [thread:$0]  %s1060, 256, %s1062, [#allocation7], 128, 128, 8
        $region60: #{tpu_custom_call.1} parent=35 // pred_fallthru
          _
        // Predicated region
        $region61: #{tpu_custom_call.1} parent=35 // pred_check
          %p1068 = pneg %p178
        $region62: #{tpu_custom_call.1} parent=35 // pred_check_branch
          %1070 = sbr.rel (%p1068) target = $region64
        $region63: #{tpu_custom_call.1} parent=35 // pred_region
          %1072 = dma.done [#allocation7], 256
        $region64: #{tpu_custom_call.1} parent=35 // pred_fallthru
          _
      $region36: #{tpu_custom_call.1} parent=5 // pred_fallthru
        _
      %p1073 = scmp.le.s32.totalorder 2, %s26
      // Predicated region
      $region65: #{tpu_custom_call.1} parent=5 // pred_check
        %p1074 = pneg %p1073
      $region66: #{tpu_custom_call.1} parent=5 // pred_check_branch
        %1076 = sbr.rel (%p1074) target = $region68
      $region67: #{tpu_custom_call.1} parent=5 // pred_region
        %s1077 = ssub.s32 %s26, 2
      $region68: #{tpu_custom_call.1} parent=5 // pred_fallthru
        _
    $region6: #{tpu_custom_call.1} parent=1 // loop_footer
      %s30 = sadd.s32 1, %s26
    $region7: #{tpu_custom_call.1} parent=1 // loop_footer_branch
      %25 = sbr.rel target = $region3
    $region8: #{tpu_custom_call.1} parent=1 // loop_exit
      _
    %1078 = vsyncpa [#allocation6], 1
    %s1079 = scalar_lea.sflag [#allocation6], 1
    %1080 = vsyncpa %s1079, 1
    %1081 = vsyncpa [#allocation9], 1
    %s1082 = scalar_lea.sflag [#allocation9], 1
    %1083 = vsyncpa %s1082, 1
    %1084 = vsyncpa [#allocation7], 1
    %s1085 = scalar_lea.sflag [#allocation7], 1
    %1086 = vsyncpa %s1085, 1

</llo_original>
